<compile_context>
chip_gen: v7x
topology: tpu7x:2x2x1
jax: 0.10.0
libtpu: 0.0.40
codegen_flags: <defaults>
</compile_context>

<pallas_src>
import functools

import jax
import jax.numpy as jnp
from jax import lax
from jax.experimental import pallas as pl
from jax.experimental.pallas import tpu as pltpu


def _conv1x1_lrelu_kernel(x_ref, w_ref, o_ref, *, negative_slope, cin, use_mxu):
    # x_ref: (Cin, TS)   spatial tile of one batch element (NCHW layout)
    # w_ref: (Cout, Cin) full weight matrix (constant block index -> resident)
    # o_ref: (Cout, TS)  lane-dense output tile
    x = x_ref[...]
    w = w_ref[...]
    if use_mxu:
        # No explicit f32 upcasts: bf16 inputs use the native MXU path;
        # HIGHEST precision keeps f32 inputs at f32 accuracy (multi-pass is
        # hidden behind the DMA in this memory-bound kernel).
        acc = jnp.dot(w, x, preferred_element_type=jnp.float32,
                      precision=lax.Precision.HIGHEST)
    else:
        # Only taken for cin <= 3: short, fully unrolled VPU broadcast-FMA.
        cout = w.shape[0]
        ts = x.shape[1]
        acc = jnp.zeros((cout, ts), jnp.float32)
        for c in range(cin):
            acc = acc + (w[:, c:c + 1].astype(jnp.float32) *
                         x[c:c + 1, :].astype(jnp.float32))
    y = jnp.where(acc > 0, acc, negative_slope * acc)  # LeakyReLU(0.2)
    o_ref[...] = y.astype(o_ref.dtype)


def _vmem_budget_bytes():
    """Generation-aware (budget, vmem_limit) in bytes."""
    try:
        phys = pltpu.get_tpu_info().vmem_capacity_bytes
    except Exception:
        phys = 64 << 20  # conservative fallback = v7x per-TC physical VMEM
    budget = min(phys // 4, 24 << 20)   # data we plan to keep live
    limit = min(phys // 2, 32 << 20)    # scoped limit passed to the compiler
    return budget, limit


def _choose_spatial_tile(hw, cin, cout, itemsize, vmem_budget_bytes,
                         max_tile=32768):
    """Largest multiple-of-128 spatial tile that fits the VMEM budget."""
    # Per spatial column: double-buffered input + output tiles, plus the f32
    # accumulator and one f32 temporary for the activation.
    per_col = 2 * (cin + cout) * itemsize + 2 * cout * 4
    weight_bytes = 2 * cout * cin * itemsize  # resident (double-buffered) weight
    avail = max(vmem_budget_bytes - weight_bytes, 128 * per_col)
    tile = max(128, (avail // per_col) // 128 * 128)
    tile = min(tile, max_tile)
    hw_rounded = pl.cdiv(hw, 128) * 128  # never exceed the (rounded) extent
    return min(tile, hw_rounded)


def first_conv(x_nchw, weight_oi, *, negative_slope=0.2):
    """x_nchw: (N, Cin, H, W); weight_oi: (Cout, Cin) (squeezed 1x1 kernel)."""
    n, cin, h, w = x_nchw.shape
    cout = weight_oi.shape[0]
    hw = h * w

    # NCHW -> (N, Cin, H*W): metadata-only reshape, no transpose, no copy.
    x_flat = x_nchw.reshape(n, cin, hw)

    budget, vmem_limit = _vmem_budget_bytes()
    tile_s = _choose_spatial_tile(hw, cin, cout, x_nchw.dtype.itemsize, budget)
    n_s_tiles = pl.cdiv(hw, tile_s)
    # Note: on v7x (2 TCs) prefer n * n_s_tiles >= 4 so both cores get work;
    # for tiny inputs (as in the demo) this kernel is far from mattering.

    use_mxu = cin >= 4  # review: route cin >= ~4 through the MXU
    kernel = functools.partial(_conv1x1_lrelu_kernel,
                               negative_slope=negative_slope,
                               cin=cin, use_mxu=use_mxu)

    out_flat = pl.pallas_call(
        kernel,
        out_shape=jax.ShapeDtypeStruct((n, cout, hw), x_nchw.dtype),
        grid_spec=pltpu.PrefetchScalarGridSpec(
            num_scalar_prefetch=0,
            grid=(n, n_s_tiles),
            in_specs=[
                # (Cin, TS) spatial tile of batch element b; partial last
                # block is handled by Pallas (masked stores on the output).
                pl.BlockSpec((pl.Squeezed(), cin, tile_s),
                             lambda b, s: (b, 0, s)),
                # full weight, constant block index -> stays resident in VMEM
                pl.BlockSpec((cout, cin), lambda b, s: (0, 0)),
            ],
            out_specs=pl.BlockSpec((pl.Squeezed(), cout, tile_s),
                                   lambda b, s: (b, 0, s)),
        ),
        compiler_params=pltpu.CompilerParams(
            dimension_semantics=("parallel", "parallel"),
            vmem_limit_bytes=int(vmem_limit)),
    )(x_flat, weight_oi)

    # (N, Cout, H*W) -> NCHW: metadata-only reshape.
    return out_flat.reshape(n, cout, h, w)


def reference_first_conv(x_nchw, weight_oi, negative_slope=0.2):
    y = jnp.einsum("nchw,oc->nohw", x_nchw, weight_oi,
                   precision=lax.Precision.HIGHEST)
    return jnp.where(y > 0, y, negative_slope * y)


if __name__ == "__main__":
    key = jax.random.PRNGKey(0)
    kx, kw = jax.random.split(key)

    batch, in_channels, out_channels, spatial = 2, 4, 8, 16
    x = jax.random.normal(kx, (batch, in_channels, spatial, spatial),
                          dtype=jnp.float32)
    # Conv2d(in, out, kernel_size=1, bias=False) weight: (out, in, 1, 1)
    weight4d = jax.random.normal(
        kw, (out_channels, in_channels, 1, 1),
        dtype=jnp.float32) * (1.0 / in_channels ** 0.5)
    weight = weight4d[:, :, 0, 0]

    out = jax.block_until_ready(first_conv(x, weight))

    ref = reference_first_conv(x, weight)
    assert out.shape == (batch, out_channels, spatial, spatial)
    assert jnp.allclose(out, ref, atol=1e-4, rtol=1e-4)

    print("KERNEL_OK")
</pallas_src>

<mosaic_0001>
module attributes {stable_mosaic.version = 11 : i64} {
  func.func @_conv1x1_lrelu_kernel(%arg0: i32, %arg1: i32, %arg2: memref<1x4x256xf32, #tpu.memory_space<vmem>>, %arg3: memref<8x4xf32, #tpu.memory_space<vmem>>, %arg4: memref<1x8x256xf32, #tpu.memory_space<vmem>>) attributes {dimension_semantics = [#tpu.dimension_semantics<parallel>, #tpu.dimension_semantics<parallel>], iteration_bounds = array<i64: 2, 1>, scalar_prefetch = 0 : i64, scratch_operands = 0 : i64, tpu.core_type = #tpu.core_type<tc>, window_params = [{transform_indices = @transform_0, window_bounds = array<i64: 1, 4, 256>}, {pipeline_mode = #tpu.pipeline_mode<synchronous>, transform_indices = @transform_1, window_bounds = array<i64: 8, 4>}, {transform_indices = @transform_2, window_bounds = array<i64: 1, 8, 256>}]} {
    %c0 = arith.constant 0 : index
    %c0_0 = arith.constant 0 : index
    %c0_1 = arith.constant 0 : index
    %0 = vector.load %arg2[%c0, %c0_0, %c0_1] : memref<1x4x256xf32, #tpu.memory_space<vmem>>, vector<1x4x256xf32>
    %1 = vector.shape_cast %0 : vector<1x4x256xf32> to vector<4x256xf32>
    %c0_2 = arith.constant 0 : index
    %c0_3 = arith.constant 0 : index
    %2 = vector.load %arg3[%c0_2, %c0_3] : memref<8x4xf32, #tpu.memory_space<vmem>>, vector<8x4xf32>
    %cst = arith.constant dense<0.000000e+00> : vector<8x256xf32>
    %3 = tpu.matmul %2, %1, %cst {dimension_numbers = #tpu.dot_dimension_numbers<[1], [0], [0], [1], [0, 0, 1, 1], [], []>, precision = #tpu.contract_precision<fp32>} : vector<8x4xf32>, vector<4x256xf32>, vector<8x256xf32> -> vector<8x256xf32>
    %cst_4 = arith.constant 0.000000e+00 : f32
    %4 = vector.broadcast %cst_4 : f32 to vector<8x256xf32>
    %5 = arith.cmpf ogt, %3, %4 : vector<8x256xf32>
    %cst_5 = arith.constant 2.000000e-01 : f32
    %6 = vector.broadcast %cst_5 : f32 to vector<8x256xf32>
    %7 = arith.mulf %6, %3 : vector<8x256xf32>
    %8 = arith.select %5, %3, %7 : vector<8x256xi1>, vector<8x256xf32>
    %c0_6 = arith.constant 0 : index
    %c0_7 = arith.constant 0 : index
    %c0_8 = arith.constant 0 : index
    %9 = vector.load %arg4[%c0_6, %c0_7, %c0_8] : memref<1x8x256xf32, #tpu.memory_space<vmem>>, vector<1x8x256xf32>
    %10 = vector.shape_cast %9 : vector<1x8x256xf32> to vector<8x256xf32>
    %11 = vector.shape_cast %8 : vector<8x256xf32> to vector<1x8x256xf32>
    tpu.vector_store %arg4[%c0_6, %c0_7, %c0_8], %11 {strides = array<i32>} : memref<1x8x256xf32, #tpu.memory_space<vmem>>, vector<1x8x256xf32>,
    return
  }
  func.func @transform_0(%arg0: i32, %arg1: i32) -> (i32, i32, i32) {
    %c0_i32 = arith.constant 0 : i32
    %c0_i32_0 = arith.constant 0 : i32
    return %arg0, %c0_i32, %arg1 : i32, i32, i32
  }
  func.func @transform_1(%arg0: i32, %arg1: i32) -> (i32, i32) {
    %c0_i32 = arith.constant 0 : i32
    %c0_i32_0 = arith.constant 0 : i32
    %c0_i32_1 = arith.constant 0 : i32
    return %c0_i32, %c0_i32_0 : i32, i32
  }
  func.func @transform_2(%arg0: i32, %arg1: i32) -> (i32, i32, i32) {
    %c0_i32 = arith.constant 0 : i32
    %c0_i32_0 = arith.constant 0 : i32
    return %arg0, %c0_i32, %arg1 : i32, i32, i32
  }
}

</mosaic_0001>

<llo_original>
// kernel: tpu_custom_call.1
$region0: #{tpu_custom_call.1}
  #allocation0 [shape = 'u32[]', space=smem, size = 0x4, offset = 0x4, fixed_abs, tag = 'smem constant byte address 0x4 - core index']
  #allocation1 [shape = 'u32[144,128]{1,0:T(1,128)}', space=vmem, size = 0x12000, scoped, tag = 'internal scratch']
  %s0 = inlined_call_operand.hbm [shape: f32[2,4,256], index: 0, kind: input, shape index: {}]
  %s1 = inlined_call_operand.vmem [shape: f32[8,4], index: 1, kind: input, shape index: {}]
  %s2 = inlined_call_operand.hbm [shape: f32[2,8,256], index: 2, kind: output, shape index: {}]
  %s3 = sld [smem:[#allocation0]]
  $region45: #{tpu_custom_call.1} parent=0
    _
  %s5 = ssub.s32 1, %s3
  %s6 = scalar_select 0, %s5, %s3
  $region1: #{tpu_custom_call.1} parent=0
    #allocation2 [shape = 'u8[8192]{0}', space=vmem, size = 0x2000, scoped, tag = 'input window, operand 0']
    #allocation3 [shape = 's32[2]{0}', space=sflag, size = 0x8, scoped, tag = 'scoped memory for tpu_custom_call.1']
    #allocation4 [shape = 's32[2]{0}', space=sflag, size = 0x8, scoped, tag = 'scoped memory for tpu_custom_call.1']
    #allocation5 [shape = 'u8[16384]{0}', space=vmem, size = 0x4000, scoped, tag = 'output window, operand 0']
    %7 = vsyncpa [#allocation3], 0
    %s8 = scalar_lea.sflag [#allocation3], 1
    %9 = vsyncpa %s8, 0
    %10 = vsyncpa [#allocation4], 0
    %s11 = scalar_lea.sflag [#allocation4], 1
    %12 = vsyncpa %s11, 0
    loop: start=0, step=1, limit=4
    $region2: #{tpu_custom_call.1} parent=1 // loop_pre_header
      _
    $region3: #{tpu_custom_call.1} parent=1 // loop_header
      %s14 = sphi 0, %s18
      %p15 = scmp.ge.s32.totalorder %s14, 4
      %s21 = sphi 0, %s33
      %s22 = sphi 0, %s29
      %s23 = sphi 0, %s21
      %s24 = sphi 0, %s22
      %s25 = sphi 0, %s23
      %s26 = sphi 0, %s24
      %s38 = sphi 0, %s40
      %s41 = sphi 0, %s38
      %s42 = sphi 0, %s41
      %s58 = sphi 0, %s42
      %s62 = sphi 0, %s62
      %s64 = sphi 0, %s62
      %s65 = sphi 0, %s64
      %s79 = sphi 0, %s65
      %s87 = sphi 0, %s89
      %s90 = sphi 0, %s87
      %s91 = sphi 0, %s90
      %s107 = sphi 0, %s91
    $region4: #{tpu_custom_call.1} parent=1 // loop_header_branch
      %17 = sbr.rel (%p15) target = $region8
    $region5: #{tpu_custom_call.1} parent=1 // loop_body
      %s19 = ssub.s32 %s14, 1
      %s20 = ssub.s32 %s14, 2
      %s27 = sadd.s32 1, %s22
      %p28 = scmp.ge.s32.totalorder %s27, 1
      %s29 = scalar_select %p28, 0, %s27
      %s30 = sadd.s32 1, %s21
      %s31 = scalar_select %p28, %s30, %s21
      %p32 = scmp.ge.s32.totalorder %s31, 2
      %s33 = scalar_select %p32, 0, %s31
      %s34 = ssub.s32 %s21, %s33
      %s35 = ssub.s32 %s22, %s29
      %s36 = sor.u32 %s34, %s35
      %p37 = scmp.eq.s32.totalorder %s36, 0
      %s39 = sadd.s32 %s38, 1
      %s40 = scalar_select %p37, %s38, %s39
      %p43 = pneg %p37
      %p44 = scmp.eq.s32.totalorder %s14, 1
      %p45 = por %p43, %p44
      %p46 = scmp.ne.s32.totalorder %s38, %s41
      %p47 = scmp.eq.s32.totalorder %s14, 0
      %p48 = por %p46, %p47
      %p49 = scmp.ne.s32.totalorder %s38, %s41
      %p50 = scmp.eq.s32.totalorder %s19, 1
      %p51 = por %p49, %p50
      %p52 = scmp.ne.s32.totalorder %s41, %s42
      %p53 = scmp.eq.s32.totalorder %s19, 0
      %p54 = por %p52, %p53
      %p55 = scmp.ne.s32.totalorder %s41, %s42
      %p56 = scmp.eq.s32.totalorder %s20, 1
      %p57 = por %p55, %p56
      %p59 = scmp.ne.s32.totalorder %s42, %s58
      %p60 = scmp.eq.s32.totalorder %s20, 0
      %p61 = por %p59, %p60
      %s63 = sadd.s32 %s62, 1
      %p66 = scmp.eq.s32.totalorder %s14, 1
      %p67 = scmp.ne.s32.totalorder %s62, %s64
      %p68 = scmp.eq.s32.totalorder %s14, 0
      %p69 = por %p67, %p68
      %p70 = scmp.ne.s32.totalorder %s62, %s64
      %p71 = scmp.eq.s32.totalorder %s19, 1
      %p72 = por %p70, %p71
      %p73 = scmp.ne.s32.totalorder %s64, %s65
      %p74 = scmp.eq.s32.totalorder %s19, 0
      %p75 = por %p73, %p74
      %p76 = scmp.ne.s32.totalorder %s64, %s65
      %p77 = scmp.eq.s32.totalorder %s20, 1
      %p78 = por %p76, %p77
      %p80 = scmp.ne.s32.totalorder %s65, %s79
      %p81 = scmp.eq.s32.totalorder %s20, 0
      %p82 = por %p80, %p81
      %s83 = ssub.s32 %s21, %s33
      %s84 = ssub.s32 %s22, %s29
      %s85 = sor.u32 %s83, %s84
      %p86 = scmp.eq.s32.totalorder %s85, 0
      %s88 = sadd.s32 %s87, 1
      %s89 = scalar_select %p86, %s87, %s88
      %p92 = pneg %p86
      %p93 = scmp.eq.s32.totalorder %s14, 1
      %p94 = por %p92, %p93
      %p95 = scmp.ne.s32.totalorder %s87, %s90
      %p96 = scmp.eq.s32.totalorder %s14, 0
      %p97 = por %p95, %p96
      %p98 = scmp.ne.s32.totalorder %s87, %s90
      %p99 = scmp.eq.s32.totalorder %s19, 1
      %p100 = por %p98, %p99
      %p101 = scmp.ne.s32.totalorder %s90, %s91
      %p102 = scmp.eq.s32.totalorder %s19, 0
      %p103 = por %p101, %p102
      %p104 = scmp.ne.s32.totalorder %s90, %s91
      %p105 = scmp.eq.s32.totalorder %s20, 1
      %p106 = por %p104, %p105
      %p108 = scmp.ne.s32.totalorder %s91, %s107
      %p109 = scmp.eq.s32.totalorder %s20, 0
      %p110 = por %p108, %p109
      %p111 = scmp.le.s32.totalorder 1, %s14
      %p112 = scmp.lt.s32.totalorder %s14, 3
      %p113 = pnand %p111, %p112
      %p114 = pneg %p113
      // Predicated region
      $region9: #{tpu_custom_call.1} parent=5 // pred_check
        _
      $region10: #{tpu_custom_call.1} parent=5 // pred_check_branch
        %116 = sbr.rel (%p113) target = $region12
      $region11: #{tpu_custom_call.1} parent=5 // pred_region
        %s117 = ssub.s32 %s14, 1
        // Predicated region
        $region13: #{tpu_custom_call.1} parent=11 // pred_check
          %p118 = pneg %p75
        $region14: #{tpu_custom_call.1} parent=11 // pred_check_branch
          %120 = sbr.rel (%p118) target = $region16
        $region15: #{tpu_custom_call.1} parent=11 // pred_region
          _
        $region16: #{tpu_custom_call.1} parent=11 // pred_fallthru
          _
      $region12: #{tpu_custom_call.1} parent=5 // pred_fallthru
        _
      %p121 = scmp.lt.s32.totalorder %s14, 2
      // Predicated region
      $region17: #{tpu_custom_call.1} parent=5 // pred_check
        %p122 = pneg %p121
      $region18: #{tpu_custom_call.1} parent=5 // pred_check_branch
        %124 = sbr.rel (%p122) target = $region20
      $region19: #{tpu_custom_call.1} parent=5 // pred_region
        // Predicated region
        $region21: #{tpu_custom_call.1} parent=19 // pred_check
          %p125 = pneg %p48
        $region22: #{tpu_custom_call.1} parent=19 // pred_check_branch
          %127 = sbr.rel (%p125) target = $region24
        $region23: #{tpu_custom_call.1} parent=19 // pred_region
          %s128 = sand.u32 %s38, 1
          %s129 = scalar_lea.sflag [#allocation3], %s128
          %s130 = sand.u32 %s38, 1
          %s131 = smul.addr %s130, 8
          %s132 = scalar_lea.vmem [#allocation2], %s131
          %s133 = smul.u32 2, %s22
          %s135 = ssub.s32 128, 128
          %136 = vsyncadd %s129, %s135
          %s137 = smul.addr %s21, 2
          %s138 = sadd.s32 %s133, %s137
          %s139 = smul.addr %s138, 64
          %s140 = scalar_lea.hbm %s0, %s139
          %s142 = sshll.u32 %s132, 4
          %s143 = int_to_ptr.vmem [resolvable:$true] %s142
          %145 = dma.hbm_to_vmem [thread:$0]  %s140, 128, %s143, %s129
        $region24: #{tpu_custom_call.1} parent=19 // pred_fallthru
          _
      $region20: #{tpu_custom_call.1} parent=5 // pred_fallthru
        _
      %p146 = scmp.le.s32.totalorder 1, %s14
      %p147 = scmp.lt.s32.totalorder %s14, 3
      %p148 = pnand %p146, %p147
      %p149 = pneg %p148
      // Predicated region
      $region25: #{tpu_custom_call.1} parent=5 // pred_check
        _
      $region26: #{tpu_custom_call.1} parent=5 // pred_check_branch
        %151 = sbr.rel (%p148) target = $region28
      $region27: #{tpu_custom_call.1} parent=5 // pred_region
        %s152 = ssub.s32 %s14, 1
        %s153 = sand.u32 %s41, 1
        %s154 = scalar_lea.sflag [#allocation3], %s153
        %s155 = sand.u32 %s41, 1
        %s156 = smul.addr %s155, 8
        %s157 = scalar_lea.vmem [#allocation2], %s156
        // Predicated region
        $region29: #{tpu_custom_call.1} parent=27 // pred_check
          %p158 = pneg %p54
        $region30: #{tpu_custom_call.1} parent=27 // pred_check_branch
          %160 = sbr.rel (%p158) target = $region32
        $region31: #{tpu_custom_call.1} parent=27 // pred_region
          %161 = dma.done %s154, 128
        $region32: #{tpu_custom_call.1} parent=27 // pred_fallthru
          _
        %s162 = sand.u32 %s41, 1
        %s163 = scalar_lea.sflag [#allocation3], %s162
        %s164 = sand.u32 %s41, 1
        %s165 = smul.addr %s164, 8
        %s166 = scalar_lea.vmem [#allocation2], %s165
        %p167 = pneg %p54
        %p168 = pneg %p51
        %p169 = pneg %p75
        %p170 = pneg %p72
        %p171 = pneg %p103
        %p172 = pneg %p100
        %s173 = sand.u32 %s90, 1
        %s174 = scalar_lea.sflag [#allocation4], %s173
        %s175 = sand.u32 %s90, 1
        %s176 = smul.addr %s175, 16
        %s177 = scalar_lea.vmem [#allocation5], %s176
        %s178 = smul.u32 2, %s24
        %s179 = smul.u32 2, %s24
        %v180 = vld [vmem:[%s157] sm:$0xff]
        %v181 = vld [vmem:[%s1] sm:$0xff]
        %v183 = vcombine.high %v180, %v180
        %vm184 = vcmask 31744
        %v186 = vsel %vm184, %v181, 0
        %vm188 = vcmask 1043456
        %v189 = vsel %vm188, %v180, 0
        %v191 = vsel %vm188, %v183, 0
        %v193 = vand.u32 %v191, 4294901760
        %194 = vmatprep.subr.mxu0 %v193
        %v195 = vand.u32 %v189, 4294901760
        %196 = vmatpush1.msra.mxu0 %v195
        %197 = vmatprep.subr.mxu0 0.0
        %198 = vmatpush1.msra.mxu0 0.0
        %199 = vmatprep.subr.mxu0 0.0
        %200 = vmatpush1.msra.mxu0 0.0
        %201 = vmatprep.subr.mxu0 0.0
        %202 = vmatpush1.msra.mxu0 0.0
        %203 = vmatprep.subr.mxu0 0.0
        %204 = vmatpush1.msra.mxu0 0.0
        %205 = vmatprep.subr.mxu0 0.0
        %206 = vmatpush1.msra.mxu0 0.0
        %207 = vmatprep.subr.mxu0 0.0
        %208 = vmatpush1.msra.mxu0 0.0
        %209 = vmatprep.subr.mxu0 0.0
        %210 = vmatpush1.msra.mxu0 0.0
        %211 = vmatprep.subr.mxu0 0.0
        %212 = vmatpush1.msra.mxu0 0.0
        %213 = vmatprep.subr.mxu0 0.0
        %214 = vmatpush1.msra.mxu0 0.0
        %215 = vmatprep.subr.mxu0 0.0
        %216 = vmatpush1.msra.mxu0 0.0
        %217 = vmatprep.subr.mxu0 0.0
        %218 = vmatpush1.msra.mxu0 0.0
        %219 = vmatprep.subr.mxu0 0.0
        %220 = vmatpush1.msra.mxu0 0.0
        %221 = vmatprep.subr.mxu0 0.0
        %222 = vmatpush1.msra.mxu0 0.0
        %223 = vmatprep.subr.mxu0 0.0
        %224 = vmatpush1.msra.mxu0 0.0
        %225 = vmatprep.subr.mxu0 0.0
        %226 = vmatpush1.msra.mxu0 0.0
        %227 = vmatprep.subr.mxu0 0.0
        %228 = vmatpush1.msra.mxu0 0.0
        %229 = vmatprep.subr.mxu0 0.0
        %230 = vmatpush1.msra.mxu0 0.0
        %231 = vmatprep.subr.mxu0 0.0
        %232 = vmatpush1.msra.mxu0 0.0
        %233 = vmatprep.subr.mxu0 0.0
        %234 = vmatpush1.msra.mxu0 0.0
        %235 = vmatprep.subr.mxu0 0.0
        %236 = vmatpush1.msra.mxu0 0.0
        %237 = vmatprep.subr.mxu0 0.0
        %238 = vmatpush1.msra.mxu0 0.0
        %239 = vmatprep.subr.mxu0 0.0
        %240 = vmatpush1.msra.mxu0 0.0
        %241 = vmatprep.subr.mxu0 0.0
        %242 = vmatpush1.msra.mxu0 0.0
        %243 = vmatprep.subr.mxu0 0.0
        %244 = vmatpush1.msra.mxu0 0.0
        %245 = vmatprep.subr.mxu0 0.0
        %246 = vmatpush1.msra.mxu0 0.0
        %247 = vmatprep.subr.mxu0 0.0
        %248 = vmatpush1.msra.mxu0 0.0
        %249 = vmatprep.subr.mxu0 0.0
        %250 = vmatpush1.msra.mxu0 0.0
        %251 = vmatprep.subr.mxu0 0.0
        %252 = vmatpush1.msra.mxu0 0.0
        %253 = vmatprep.subr.mxu0 0.0
        %254 = vmatpush1.msra.mxu0 0.0
        %255 = vmatprep.subr.mxu0 0.0
        %256 = vmatpush1.msra.mxu0 0.0
        %257 = vmatprep.subr.mxu0 0.0
        %258 = vmatpush1.msra.mxu0 0.0
        %259 = vmatprep.mubr.f32.mxu0 0.0
        %v260 = vand.u32 %v186, 4294901760
        %v261 = vsub.f32 %v186, %v260
        %v262 = vand.u32 %v261, 4294901760
        %v263 = vsub.f32 %v261, %v262
        %v264 = vand.u32 %v263, 4294901760
        %265 = vmatmul.mubr.f32.gmra.mrb[0].mxu0 %v264
        %v266 = vpop.f32.mrb[0].mxu0
        %v267 = vadd.f32 0.0, %v266
        %v268 = vpop.f32.mrb[0].mxu0
        %v269 = vadd.f32 0.0, %v268
        %270 = vdwg.mxu0
        %v271 = vand.u32 %v191, 4294901760
        %v272 = vsub.f32 %v191, %v271
        %v273 = vand.u32 %v272, 4294901760
        %v274 = vsub.f32 %v272, %v273
        %v275 = vand.u32 %v274, 4294901760
        %276 = vmatprep.subr.mxu0 %v275
        %v277 = vand.u32 %v189, 4294901760
        %v278 = vsub.f32 %v189, %v277
        %v279 = vand.u32 %v278, 4294901760
        %v280 = vsub.f32 %v278, %v279
        %v281 = vand.u32 %v280, 4294901760
        %282 = vmatpush1.msra.mxu0 %v281
        %283 = vmatprep.subr.mxu0 0.0
        %284 = vmatpush1.msra.mxu0 0.0
        %285 = vmatprep.subr.mxu0 0.0
        %286 = vmatpush1.msra.mxu0 0.0
        %287 = vmatprep.subr.mxu0 0.0
        %288 = vmatpush1.msra.mxu0 0.0
        %289 = vmatprep.subr.mxu0 0.0
        %290 = vmatpush1.msra.mxu0 0.0
        %291 = vmatprep.subr.mxu0 0.0
        %292 = vmatpush1.msra.mxu0 0.0
        %293 = vmatprep.subr.mxu0 0.0
        %294 = vmatpush1.msra.mxu0 0.0
        %295 = vmatprep.subr.mxu0 0.0
        %296 = vmatpush1.msra.mxu0 0.0
        %297 = vmatprep.subr.mxu0 0.0
        %298 = vmatpush1.msra.mxu0 0.0
        %299 = vmatprep.subr.mxu0 0.0
        %300 = vmatpush1.msra.mxu0 0.0
        %301 = vmatprep.subr.mxu0 0.0
        %302 = vmatpush1.msra.mxu0 0.0
        %303 = vmatprep.subr.mxu0 0.0
        %304 = vmatpush1.msra.mxu0 0.0
        %305 = vmatprep.subr.mxu0 0.0
        %306 = vmatpush1.msra.mxu0 0.0
        %307 = vmatprep.subr.mxu0 0.0
        %308 = vmatpush1.msra.mxu0 0.0
        %309 = vmatprep.subr.mxu0 0.0
        %310 = vmatpush1.msra.mxu0 0.0
        %311 = vmatprep.subr.mxu0 0.0
        %312 = vmatpush1.msra.mxu0 0.0
        %313 = vmatprep.subr.mxu0 0.0
        %314 = vmatpush1.msra.mxu0 0.0
        %315 = vmatprep.subr.mxu0 0.0
        %316 = vmatpush1.msra.mxu0 0.0
        %317 = vmatprep.subr.mxu0 0.0
        %318 = vmatpush1.msra.mxu0 0.0
        %319 = vmatprep.subr.mxu0 0.0
        %320 = vmatpush1.msra.mxu0 0.0
        %321 = vmatprep.subr.mxu0 0.0
        %322 = vmatpush1.msra.mxu0 0.0
        %323 = vmatprep.subr.mxu0 0.0
        %324 = vmatpush1.msra.mxu0 0.0
        %325 = vmatprep.subr.mxu0 0.0
        %326 = vmatpush1.msra.mxu0 0.0
        %327 = vmatprep.subr.mxu0 0.0
        %328 = vmatpush1.msra.mxu0 0.0
        %329 = vmatprep.subr.mxu0 0.0
        %330 = vmatpush1.msra.mxu0 0.0
        %331 = vmatprep.subr.mxu0 0.0
        %332 = vmatpush1.msra.mxu0 0.0
        %333 = vmatprep.subr.mxu0 0.0
        %334 = vmatpush1.msra.mxu0 0.0
        %335 = vmatprep.subr.mxu0 0.0
        %336 = vmatpush1.msra.mxu0 0.0
        %337 = vmatprep.subr.mxu0 0.0
        %338 = vmatpush1.msra.mxu0 0.0
        %339 = vmatprep.subr.mxu0 0.0
        %340 = vmatpush1.msra.mxu0 0.0
        %341 = vmatprep.subr.mxu0 0.0
        %342 = vmatpush1.msra.mxu0 0.0
        %343 = vmatprep.subr.mxu0 0.0
        %344 = vmatpush1.msra.mxu0 0.0
        %345 = vmatprep.mubr.f32.mxu0 0.0
        %v346 = vand.u32 %v186, 4294901760
        %347 = vmatmul.mubr.f32.gmra.mrb[0].mxu0 %v346
        %v348 = vpop.f32.mrb[0].mxu0
        %v349 = vadd.f32 %v267, %v348
        %v350 = vpop.f32.mrb[0].mxu0
        %v351 = vadd.f32 %v269, %v350
        %352 = vdwg.mxu0
        %v353 = vand.u32 %v191, 4294901760
        %v354 = vsub.f32 %v191, %v353
        %355 = vmatprep.subr.mxu0 %v354
        %v356 = vand.u32 %v189, 4294901760
        %v357 = vsub.f32 %v189, %v356
        %358 = vmatpush1.msra.mxu0 %v357
        %359 = vmatprep.subr.mxu0 0.0
        %360 = vmatpush1.msra.mxu0 0.0
        %361 = vmatprep.subr.mxu0 0.0
        %362 = vmatpush1.msra.mxu0 0.0
        %363 = vmatprep.subr.mxu0 0.0
        %364 = vmatpush1.msra.mxu0 0.0
        %365 = vmatprep.subr.mxu0 0.0
        %366 = vmatpush1.msra.mxu0 0.0
        %367 = vmatprep.subr.mxu0 0.0
        %368 = vmatpush1.msra.mxu0 0.0
        %369 = vmatprep.subr.mxu0 0.0
        %370 = vmatpush1.msra.mxu0 0.0
        %371 = vmatprep.subr.mxu0 0.0
        %372 = vmatpush1.msra.mxu0 0.0
        %373 = vmatprep.subr.mxu0 0.0
        %374 = vmatpush1.msra.mxu0 0.0
        %375 = vmatprep.subr.mxu0 0.0
        %376 = vmatpush1.msra.mxu0 0.0
        %377 = vmatprep.subr.mxu0 0.0
        %378 = vmatpush1.msra.mxu0 0.0
        %379 = vmatprep.subr.mxu0 0.0
        %380 = vmatpush1.msra.mxu0 0.0
        %381 = vmatprep.subr.mxu0 0.0
        %382 = vmatpush1.msra.mxu0 0.0
        %383 = vmatprep.subr.mxu0 0.0
        %384 = vmatpush1.msra.mxu0 0.0
        %385 = vmatprep.subr.mxu0 0.0
        %386 = vmatpush1.msra.mxu0 0.0
        %387 = vmatprep.subr.mxu0 0.0
        %388 = vmatpush1.msra.mxu0 0.0
        %389 = vmatprep.subr.mxu0 0.0
        %390 = vmatpush1.msra.mxu0 0.0
        %391 = vmatprep.subr.mxu0 0.0
        %392 = vmatpush1.msra.mxu0 0.0
        %393 = vmatprep.subr.mxu0 0.0
        %394 = vmatpush1.msra.mxu0 0.0
        %395 = vmatprep.subr.mxu0 0.0
        %396 = vmatpush1.msra.mxu0 0.0
        %397 = vmatprep.subr.mxu0 0.0
        %398 = vmatpush1.msra.mxu0 0.0
        %399 = vmatprep.subr.mxu0 0.0
        %400 = vmatpush1.msra.mxu0 0.0
        %401 = vmatprep.subr.mxu0 0.0
        %402 = vmatpush1.msra.mxu0 0.0
        %403 = vmatprep.subr.mxu0 0.0
        %404 = vmatpush1.msra.mxu0 0.0
        %405 = vmatprep.subr.mxu0 0.0
        %406 = vmatpush1.msra.mxu0 0.0
        %407 = vmatprep.subr.mxu0 0.0
        %408 = vmatpush1.msra.mxu0 0.0
        %409 = vmatprep.subr.mxu0 0.0
        %410 = vmatpush1.msra.mxu0 0.0
        %411 = vmatprep.subr.mxu0 0.0
        %412 = vmatpush1.msra.mxu0 0.0
        %413 = vmatprep.subr.mxu0 0.0
        %414 = vmatpush1.msra.mxu0 0.0
        %415 = vmatprep.subr.mxu0 0.0
        %416 = vmatpush1.msra.mxu0 0.0
        %417 = vmatprep.subr.mxu0 0.0
        %418 = vmatpush1.msra.mxu0 0.0
        %419 = vmatprep.subr.mxu0 0.0
        %420 = vmatpush1.msra.mxu0 0.0
        %421 = vmatprep.mubr.f32.mxu0 0.0
        %v422 = vand.u32 %v186, 4294901760
        %v423 = vsub.f32 %v186, %v422
        %424 = vmatmul.mubr.f32.gmra.mrb[0].mxu0 %v423
        %v425 = vpop.f32.mrb[0].mxu0
        %v426 = vadd.f32 %v349, %v425
        %v427 = vpop.f32.mrb[0].mxu0
        %v428 = vadd.f32 %v351, %v427
        %429 = vdwg.mxu0
        %v430 = vand.u32 %v191, 4294901760
        %431 = vmatprep.subr.mxu0 %v430
        %v432 = vand.u32 %v189, 4294901760
        %433 = vmatpush1.msra.mxu0 %v432
        %434 = vmatprep.subr.mxu0 0.0
        %435 = vmatpush1.msra.mxu0 0.0
        %436 = vmatprep.subr.mxu0 0.0
        %437 = vmatpush1.msra.mxu0 0.0
        %438 = vmatprep.subr.mxu0 0.0
        %439 = vmatpush1.msra.mxu0 0.0
        %440 = vmatprep.subr.mxu0 0.0
        %441 = vmatpush1.msra.mxu0 0.0
        %442 = vmatprep.subr.mxu0 0.0
        %443 = vmatpush1.msra.mxu0 0.0
        %444 = vmatprep.subr.mxu0 0.0
        %445 = vmatpush1.msra.mxu0 0.0
        %446 = vmatprep.subr.mxu0 0.0
        %447 = vmatpush1.msra.mxu0 0.0
        %448 = vmatprep.subr.mxu0 0.0
        %449 = vmatpush1.msra.mxu0 0.0
        %450 = vmatprep.subr.mxu0 0.0
        %451 = vmatpush1.msra.mxu0 0.0
        %452 = vmatprep.subr.mxu0 0.0
        %453 = vmatpush1.msra.mxu0 0.0
        %454 = vmatprep.subr.mxu0 0.0
        %455 = vmatpush1.msra.mxu0 0.0
        %456 = vmatprep.subr.mxu0 0.0
        %457 = vmatpush1.msra.mxu0 0.0
        %458 = vmatprep.subr.mxu0 0.0
        %459 = vmatpush1.msra.mxu0 0.0
        %460 = vmatprep.subr.mxu0 0.0
        %461 = vmatpush1.msra.mxu0 0.0
        %462 = vmatprep.subr.mxu0 0.0
        %463 = vmatpush1.msra.mxu0 0.0
        %464 = vmatprep.subr.mxu0 0.0
        %465 = vmatpush1.msra.mxu0 0.0
        %466 = vmatprep.subr.mxu0 0.0
        %467 = vmatpush1.msra.mxu0 0.0
        %468 = vmatprep.subr.mxu0 0.0
        %469 = vmatpush1.msra.mxu0 0.0
        %470 = vmatprep.subr.mxu0 0.0
        %471 = vmatpush1.msra.mxu0 0.0
        %472 = vmatprep.subr.mxu0 0.0
        %473 = vmatpush1.msra.mxu0 0.0
        %474 = vmatprep.subr.mxu0 0.0
        %475 = vmatpush1.msra.mxu0 0.0
        %476 = vmatprep.subr.mxu0 0.0
        %477 = vmatpush1.msra.mxu0 0.0
        %478 = vmatprep.subr.mxu0 0.0
        %479 = vmatpush1.msra.mxu0 0.0
        %480 = vmatprep.subr.mxu0 0.0
        %481 = vmatpush1.msra.mxu0 0.0
        %482 = vmatprep.subr.mxu0 0.0
        %483 = vmatpush1.msra.mxu0 0.0
        %484 = vmatprep.subr.mxu0 0.0
        %485 = vmatpush1.msra.mxu0 0.0
        %486 = vmatprep.subr.mxu0 0.0
        %487 = vmatpush1.msra.mxu0 0.0
        %488 = vmatprep.subr.mxu0 0.0
        %489 = vmatpush1.msra.mxu0 0.0
        %490 = vmatprep.subr.mxu0 0.0
        %491 = vmatpush1.msra.mxu0 0.0
        %492 = vmatprep.subr.mxu0 0.0
        %493 = vmatpush1.msra.mxu0 0.0
        %494 = vmatprep.subr.mxu0 0.0
        %495 = vmatpush1.msra.mxu0 0.0
        %496 = vmatprep.mubr.f32.mxu0 0.0
        %v497 = vand.u32 %v186, 4294901760
        %v498 = vsub.f32 %v186, %v497
        %v499 = vand.u32 %v498, 4294901760
        %500 = vmatmul.mubr.f32.gmra.mrb[0].mxu0 %v499
        %v501 = vpop.f32.mrb[0].mxu0
        %v502 = vadd.f32 %v426, %v501
        %v503 = vpop.f32.mrb[0].mxu0
        %v504 = vadd.f32 %v428, %v503
        %505 = vdwg.mxu0
        %v506 = vand.u32 %v191, 4294901760
        %v507 = vsub.f32 %v191, %v506
        %v508 = vand.u32 %v507, 4294901760
        %509 = vmatprep.subr.mxu0 %v508
        %v510 = vand.u32 %v189, 4294901760
        %v511 = vsub.f32 %v189, %v510
        %v512 = vand.u32 %v511, 4294901760
        %513 = vmatpush1.msra.mxu0 %v512
        %514 = vmatprep.subr.mxu0 0.0
        %515 = vmatpush1.msra.mxu0 0.0
        %516 = vmatprep.subr.mxu0 0.0
        %517 = vmatpush1.msra.mxu0 0.0
        %518 = vmatprep.subr.mxu0 0.0
        %519 = vmatpush1.msra.mxu0 0.0
        %520 = vmatprep.subr.mxu0 0.0
        %521 = vmatpush1.msra.mxu0 0.0
        %522 = vmatprep.subr.mxu0 0.0
        %523 = vmatpush1.msra.mxu0 0.0
        %524 = vmatprep.subr.mxu0 0.0
        %525 = vmatpush1.msra.mxu0 0.0
        %526 = vmatprep.subr.mxu0 0.0
        %527 = vmatpush1.msra.mxu0 0.0
        %528 = vmatprep.subr.mxu0 0.0
        %529 = vmatpush1.msra.mxu0 0.0
        %530 = vmatprep.subr.mxu0 0.0
        %531 = vmatpush1.msra.mxu0 0.0
        %532 = vmatprep.subr.mxu0 0.0
        %533 = vmatpush1.msra.mxu0 0.0
        %534 = vmatprep.subr.mxu0 0.0
        %535 = vmatpush1.msra.mxu0 0.0
        %536 = vmatprep.subr.mxu0 0.0
        %537 = vmatpush1.msra.mxu0 0.0
        %538 = vmatprep.subr.mxu0 0.0
        %539 = vmatpush1.msra.mxu0 0.0
        %540 = vmatprep.subr.mxu0 0.0
        %541 = vmatpush1.msra.mxu0 0.0
        %542 = vmatprep.subr.mxu0 0.0
        %543 = vmatpush1.msra.mxu0 0.0
        %544 = vmatprep.subr.mxu0 0.0
        %545 = vmatpush1.msra.mxu0 0.0
        %546 = vmatprep.subr.mxu0 0.0
        %547 = vmatpush1.msra.mxu0 0.0
        %548 = vmatprep.subr.mxu0 0.0
        %549 = vmatpush1.msra.mxu0 0.0
        %550 = vmatprep.subr.mxu0 0.0
        %551 = vmatpush1.msra.mxu0 0.0
        %552 = vmatprep.subr.mxu0 0.0
        %553 = vmatpush1.msra.mxu0 0.0
        %554 = vmatprep.subr.mxu0 0.0
        %555 = vmatpush1.msra.mxu0 0.0
        %556 = vmatprep.subr.mxu0 0.0
        %557 = vmatpush1.msra.mxu0 0.0
        %558 = vmatprep.subr.mxu0 0.0
        %559 = vmatpush1.msra.mxu0 0.0
        %560 = vmatprep.subr.mxu0 0.0
        %561 = vmatpush1.msra.mxu0 0.0
        %562 = vmatprep.subr.mxu0 0.0
        %563 = vmatpush1.msra.mxu0 0.0
        %564 = vmatprep.subr.mxu0 0.0
        %565 = vmatpush1.msra.mxu0 0.0
        %566 = vmatprep.subr.mxu0 0.0
        %567 = vmatpush1.msra.mxu0 0.0
        %568 = vmatprep.subr.mxu0 0.0
        %569 = vmatpush1.msra.mxu0 0.0
        %570 = vmatprep.subr.mxu0 0.0
        %571 = vmatpush1.msra.mxu0 0.0
        %572 = vmatprep.subr.mxu0 0.0
        %573 = vmatpush1.msra.mxu0 0.0
        %574 = vmatprep.subr.mxu0 0.0
        %575 = vmatpush1.msra.mxu0 0.0
        %576 = vmatprep.mubr.f32.mxu0 0.0
        %v577 = vand.u32 %v186, 4294901760
        %578 = vmatmul.mubr.f32.gmra.mrb[0].mxu0 %v577
        %v579 = vpop.f32.mrb[0].mxu0
        %v580 = vadd.f32 %v502, %v579
        %v581 = vpop.f32.mrb[0].mxu0
        %v582 = vadd.f32 %v504, %v581
        %583 = vdwg.mxu0
        %v584 = vand.u32 %v191, 4294901760
        %585 = vmatprep.subr.mxu0 %v584
        %v586 = vand.u32 %v189, 4294901760
        %587 = vmatpush1.msra.mxu0 %v586
        %588 = vmatprep.subr.mxu0 0.0
        %589 = vmatpush1.msra.mxu0 0.0
        %590 = vmatprep.subr.mxu0 0.0
        %591 = vmatpush1.msra.mxu0 0.0
        %592 = vmatprep.subr.mxu0 0.0
        %593 = vmatpush1.msra.mxu0 0.0
        %594 = vmatprep.subr.mxu0 0.0
        %595 = vmatpush1.msra.mxu0 0.0
        %596 = vmatprep.subr.mxu0 0.0
        %597 = vmatpush1.msra.mxu0 0.0
        %598 = vmatprep.subr.mxu0 0.0
        %599 = vmatpush1.msra.mxu0 0.0
        %600 = vmatprep.subr.mxu0 0.0
        %601 = vmatpush1.msra.mxu0 0.0
        %602 = vmatprep.subr.mxu0 0.0
        %603 = vmatpush1.msra.mxu0 0.0
        %604 = vmatprep.subr.mxu0 0.0
        %605 = vmatpush1.msra.mxu0 0.0
        %606 = vmatprep.subr.mxu0 0.0
        %607 = vmatpush1.msra.mxu0 0.0
        %608 = vmatprep.subr.mxu0 0.0
        %609 = vmatpush1.msra.mxu0 0.0
        %610 = vmatprep.subr.mxu0 0.0
        %611 = vmatpush1.msra.mxu0 0.0
        %612 = vmatprep.subr.mxu0 0.0
        %613 = vmatpush1.msra.mxu0 0.0
        %614 = vmatprep.subr.mxu0 0.0
        %615 = vmatpush1.msra.mxu0 0.0
        %616 = vmatprep.subr.mxu0 0.0
        %617 = vmatpush1.msra.mxu0 0.0
        %618 = vmatprep.subr.mxu0 0.0
        %619 = vmatpush1.msra.mxu0 0.0
        %620 = vmatprep.subr.mxu0 0.0
        %621 = vmatpush1.msra.mxu0 0.0
        %622 = vmatprep.subr.mxu0 0.0
        %623 = vmatpush1.msra.mxu0 0.0
        %624 = vmatprep.subr.mxu0 0.0
        %625 = vmatpush1.msra.mxu0 0.0
        %626 = vmatprep.subr.mxu0 0.0
        %627 = vmatpush1.msra.mxu0 0.0
        %628 = vmatprep.subr.mxu0 0.0
        %629 = vmatpush1.msra.mxu0 0.0
        %630 = vmatprep.subr.mxu0 0.0
        %631 = vmatpush1.msra.mxu0 0.0
        %632 = vmatprep.subr.mxu0 0.0
        %633 = vmatpush1.msra.mxu0 0.0
        %634 = vmatprep.subr.mxu0 0.0
        %635 = vmatpush1.msra.mxu0 0.0
        %636 = vmatprep.subr.mxu0 0.0
        %637 = vmatpush1.msra.mxu0 0.0
        %638 = vmatprep.subr.mxu0 0.0
        %639 = vmatpush1.msra.mxu0 0.0
        %640 = vmatprep.subr.mxu0 0.0
        %641 = vmatpush1.msra.mxu0 0.0
        %642 = vmatprep.subr.mxu0 0.0
        %643 = vmatpush1.msra.mxu0 0.0
        %644 = vmatprep.subr.mxu0 0.0
        %645 = vmatpush1.msra.mxu0 0.0
        %646 = vmatprep.subr.mxu0 0.0
        %647 = vmatpush1.msra.mxu0 0.0
        %648 = vmatprep.subr.mxu0 0.0
        %649 = vmatpush1.msra.mxu0 0.0
        %650 = vmatprep.mubr.f32.mxu0 0.0
        %v651 = vand.u32 %v186, 4294901760
        %652 = vmatmul.mubr.f32.gmra.mrb[0].mxu0 %v651
        %v653 = vpop.f32.mrb[0].mxu0
        %v654 = vadd.f32 %v580, %v653
        %v655 = vpop.f32.mrb[0].mxu0
        %v656 = vadd.f32 %v582, %v655
        %657 = vdwg.mxu0
        %vm658 = vcmp.gt.f32.partialorder %v654, 0.0
        %vm659 = vcmp.gt.f32.partialorder %v656, 0.0
        %v660 = vmul.f32 %v654, 0.2
        %v661 = vmul.f32 %v656, 0.2
        %v662 = vsel %vm658, %v654, %v660
        %v663 = vsel %vm659, %v656, %v661
        %664 = vst [vmem:[%s177] sm:$0xff] %v662
        %665 = vst [vmem:[%s177 + $0x8] sm:$0xff] %v663
        %s666 = sand.u32 %s90, 1
        %s667 = scalar_lea.sflag [#allocation4], %s666
        %s668 = sand.u32 %s90, 1
        %s669 = smul.addr %s668, 16
        %s670 = scalar_lea.vmem [#allocation5], %s669
        // Predicated region
        $region33: #{tpu_custom_call.1} parent=27 // pred_check
          %p671 = pneg %p100
        $region34: #{tpu_custom_call.1} parent=27 // pred_check_branch
          %673 = sbr.rel (%p671) target = $region36
        $region35: #{tpu_custom_call.1} parent=27 // pred_region
          %s674 = smul.u32 2, %s24
          %s676 = ssub.s32 256, 256
          %677 = vsyncadd %s667, %s676
          %s678 = smul.addr %s23, 2
          %s679 = sadd.s32 %s674, %s678
          %s680 = smul.addr %s679, 128
          %s681 = scalar_lea.hbm %s2, %s680
          %s683 = sshll.u32 %s670, 4
          %s684 = int_to_ptr.vmem [resolvable:$true] %s683
          %686 = dma.vmem_to_hbm [thread:$0]  %s684, 256, %s681, %s667
        $region36: #{tpu_custom_call.1} parent=27 // pred_fallthru
          _
      $region28: #{tpu_custom_call.1} parent=5 // pred_fallthru
        _
      %p687 = scmp.le.s32.totalorder 2, %s14
      // Predicated region
      $region37: #{tpu_custom_call.1} parent=5 // pred_check
        %p688 = pneg %p687
      $region38: #{tpu_custom_call.1} parent=5 // pred_check_branch
        %690 = sbr.rel (%p688) target = $region40
      $region39: #{tpu_custom_call.1} parent=5 // pred_region
        %s691 = ssub.s32 %s14, 2
        // Predicated region
        $region41: #{tpu_custom_call.1} parent=39 // pred_check
          %p692 = pneg %p106
        $region42: #{tpu_custom_call.1} parent=39 // pred_check_branch
          %694 = sbr.rel (%p692) target = $region44
        $region43: #{tpu_custom_call.1} parent=39 // pred_region
          %s695 = sand.u32 %s91, 1
          %s696 = scalar_lea.sflag [#allocation4], %s695
          %s697 = sand.u32 %s91, 1
          %s698 = smul.addr %s697, 16
          %s699 = scalar_lea.vmem [#allocation5], %s698
          %700 = dma.done %s696, 256
        $region44: #{tpu_custom_call.1} parent=39 // pred_fallthru
          _
      $region40: #{tpu_custom_call.1} parent=5 // pred_fallthru
        _
    $region6: #{tpu_custom_call.1} parent=1 // loop_footer
      %s18 = sadd.s32 1, %s14
    $region7: #{tpu_custom_call.1} parent=1 // loop_footer_branch
      %13 = sbr.rel target = $region3
    $region8: #{tpu_custom_call.1} parent=1 // loop_exit
      _
    %701 = vsyncpa [#allocation3], 1
    %s702 = scalar_lea.sflag [#allocation3], 1
    %703 = vsyncpa %s702, 1
    %704 = vsyncpa [#allocation4], 1
    %s705 = scalar_lea.sflag [#allocation4], 1
    %706 = vsyncpa %s705, 1

</llo_original>
